<compile_context>
chip_gen: v5e
topology: v5e:2x2
jax: 0.10.0
libtpu: 0.0.40
codegen_flags: <defaults>
</compile_context>

<pallas_src>
import jax
import jax.numpy as jnp
from jax.experimental import pallas as pl
from jax.experimental.pallas import tpu as pltpu


def _round_up(n, m):
    return (n + m - 1) // m * m


def _choose_tb(batch, *, tb_max=2048, quantum=256, min_tiles=2):
    """Evenly sized batch tiles: multiples of 256 (clean MXU height on every
    generation), capped at tb_max, and >= 2 tiles for training-size batches so
    v7x's two TensorCores both get work. Tiny batches get one 8-aligned tile."""
    if batch <= quantum:
        return _round_up(max(batch, 1), 8)
    n_tiles = max(min_tiles, pl.cdiv(batch, tb_max))
    return _round_up(pl.cdiv(batch, n_tiles), quantum)


def critic_kernel(xu_ref, w1_ref, w2_ref, w3_ref, o_ref):
    # Layer 1: one fused bf16 matmul over the packed [x | u | 1 | 0-pad] input.
    # b1 is the weight row of the constant-1 column, so no bias add is needed.
    acc1 = jnp.dot(xu_ref[...], w1_ref[...], preferred_element_type=jnp.float32)
    # relu on the bf16 cast (cast once, then max): identical result, half the
    # epilogue vreg ops on bf16-VALU chips (v6e/v7x).
    h1 = jnp.maximum(acc1.astype(jnp.bfloat16), 0)

    # Layer 2: b2 folded into w2 via h1's constant-1 padding column (col 400).
    acc2 = jnp.dot(h1, w2_ref[...], preferred_element_type=jnp.float32)
    h2 = jnp.maximum(acc2, 0.0)

    # Layer 3 (out_features == 1): VPU multiply + XLU cross-lane reduction
    # instead of an N=1 matmul. b3 is folded into the f32 w3 row via h2's
    # constant-1 padding column (col 300).
    q = jnp.sum(h2 * w3_ref[...], axis=-1, keepdims=True)
    o_ref[...] = q.astype(o_ref.dtype)


def critic_forward(x, u, kparams, *, tb_max=2048):
    """x: (B, state_dim) f32, u: (B, action_dim) f32. Returns (B, 1) f32."""
    w1, w2, w3 = kparams
    B = x.shape[0]
    sdim, adim = x.shape[1], u.shape[1]
    K0 = sdim + adim
    Kp, H1p = w1.shape          # padded input (32) / hidden-1 (512)
    H2p = w2.shape[1]           # padded hidden-2 (384)

    TB = _choose_tb(B, tb_max=tb_max)
    B_pad = _round_up(B, TB)

    # Fused concat + constant-1 bias column + K padding, done once wrapper-side
    # (B x 64 bytes of HBM traffic -- negligible vs. splitting the l1 matmul).
    xu = jnp.zeros((B_pad, Kp), jnp.bfloat16)
    xu = xu.at[:B, :sdim].set(x.astype(jnp.bfloat16))
    xu = xu.at[:B, sdim:K0].set(u.astype(jnp.bfloat16))
    xu = xu.at[:, K0].set(jnp.bfloat16(1.0))

    const = lambda i: (0, 0)   # weights: same block every step -> VMEM-resident

    out = pl.pallas_call(
        critic_kernel,
        out_shape=jax.ShapeDtypeStruct((B_pad, 1), jnp.float32),
        grid=(B_pad // TB,),
        in_specs=[
            pl.BlockSpec((TB, Kp), lambda i: (i, 0)),   # packed [x|u|1] tile (bf16)
            pl.BlockSpec((Kp, H1p), const),             # w1 (+b1 row)       (bf16)
            pl.BlockSpec((H1p, H2p), const),            # w2 (+b2 row)       (bf16)
            pl.BlockSpec((1, H2p), const),              # w3 row (+b3)       (f32)
        ],
        out_specs=pl.BlockSpec((TB, 1), lambda i: (i, 0)),
        compiler_params=pltpu.CompilerParams(
            dimension_semantics=("parallel",)),
    )(xu, w1, w2, w3)
    return out[:B]


def init_critic_params(key, state_dim, action_dim, h1=400, h2=300):
    """Deterministic f32 init mimicking nn.Linear default (uniform ±1/sqrt(fan_in)).

    Weights stored as (in, out) so y = x @ W + b (same math as torch's x @ W.T + b).
    """
    def linear(key, fan_in, fan_out):
        kw, kb = jax.random.split(key)
        bound = 1.0 / jnp.sqrt(fan_in)
        w = jax.random.uniform(kw, (fan_in, fan_out), jnp.float32, -bound, bound)
        b = jax.random.uniform(kb, (1, fan_out), jnp.float32, -bound, bound)
        return w, b

    k1, k2, k3 = jax.random.split(key, 3)
    w1, b1 = linear(k1, state_dim + action_dim, h1)
    w2, b2 = linear(k2, h1, h2)
    w3, b3 = linear(k3, h2, 1)
    return (w1, b1, w2, b2, w3, b3)


def prepare_kernel_params(params, state_dim, action_dim):
    """Fold all biases into the weights and pad to lane/sublane multiples.

    Layer 1 input gains a constant-1 column (index K0) whose weight row is b1.
    h1 padding column `H1` (=400) is wired to constant 1 (weight 0, "bias" 1)
    so b2 becomes w2 row H1; h2 padding column `H2` (=300) is likewise wired to
    constant 1 so b3 becomes the w3 entry at H2. Zero padding elsewhere leaves
    the math exactly unchanged.
    """
    w1, b1, w2, b2, w3, b3 = params
    K0 = state_dim + action_dim
    H1, H2 = w1.shape[1], w2.shape[1]
    H1p, H2p = _round_up(H1, 128), _round_up(H2, 128)   # 400->512, 300->384
    Kp = _round_up(K0 + 1, 32)                          # 18+1 -> 32 (bf16 packing)

    w1_aug = jnp.zeros((Kp, H1p), jnp.float32)
    w1_aug = w1_aug.at[:K0, :H1].set(w1)
    w1_aug = w1_aug.at[K0, :H1].set(b1.reshape(H1))     # folded b1
    w1_aug = w1_aug.at[K0, H1].set(1.0)                 # h1[:, H1] == 1 after relu

    w2_aug = jnp.zeros((H1p, H2p), jnp.float32)
    w2_aug = w2_aug.at[:H1, :H2].set(w2)
    w2_aug = w2_aug.at[H1, :H2].set(b2.reshape(H2))     # folded b2
    w2_aug = w2_aug.at[H1, H2].set(1.0)                 # h2[:, H2] == 1 after relu

    w3_aug = jnp.zeros((1, H2p), jnp.float32)           # f32 head row (VPU/XLU)
    w3_aug = w3_aug.at[0, :H2].set(w3.reshape(H2))
    w3_aug = w3_aug.at[0, H2].set(b3.reshape(()))       # folded b3

    return (w1_aug.astype(jnp.bfloat16), w2_aug.astype(jnp.bfloat16), w3_aug)


def critic_reference_bf16(x, u, kparams):
    """Plain-JAX mirror of the kernel math (same packing / bf16 casts)."""
    w1, w2, w3 = kparams
    B = x.shape[0]
    sdim = x.shape[1]
    K0 = sdim + u.shape[1]
    Kp = w1.shape[0]
    xu = jnp.zeros((B, Kp), jnp.bfloat16)
    xu = xu.at[:, :sdim].set(x.astype(jnp.bfloat16))
    xu = xu.at[:, sdim:K0].set(u.astype(jnp.bfloat16))
    xu = xu.at[:, K0].set(jnp.bfloat16(1.0))
    h1 = jnp.maximum(
        jnp.dot(xu, w1, preferred_element_type=jnp.float32).astype(jnp.bfloat16), 0)
    h2 = jnp.maximum(jnp.dot(h1, w2, preferred_element_type=jnp.float32), 0.0)
    return jnp.sum(h2 * w3, axis=-1, keepdims=True)


if __name__ == "__main__":
    # vm_num = 2  ->  state_dim = 12, action_dim = 6
    vm_num = 2
    state_dim = 6 * vm_num
    action_dim = 3 * vm_num
    batch = 2

    key = jax.random.PRNGKey(0)
    kx, ku, kp = jax.random.split(key, 3)
    x = jax.random.normal(kx, (batch, state_dim), jnp.float32)
    u = jax.random.normal(ku, (batch, action_dim), jnp.float32)

    params = init_critic_params(kp, state_dim, action_dim)
    kparams = prepare_kernel_params(params, state_dim, action_dim)

    q = critic_forward(x, u, kparams)
    jax.block_until_ready(q)
    assert q.shape == (batch, 1)

    # Tight check against a plain-JAX mirror of the kernel (same bf16 math).
    ref_bf16 = critic_reference_bf16(x, u, kparams)
    assert jnp.allclose(q, ref_bf16, atol=1e-3, rtol=1e-3)

    # Loose semantics check against the original (unpadded, f32) module math.
    w1, b1, w2, b2, w3, b3 = params
    xu = jnp.concatenate([x, u], axis=1)
    ref32 = jnp.maximum(xu @ w1 + b1, 0.0)
    ref32 = jnp.maximum(ref32 @ w2 + b2, 0.0)
    ref32 = ref32 @ w3 + b3
    assert jnp.allclose(q, ref32, atol=5e-2, rtol=5e-2)

    print("KERNEL_OK")
</pallas_src>

<mosaic_0001>
module attributes {stable_mosaic.version = 11 : i64} {
  func.func @critic_kernel(%arg0: i32, %arg1: memref<8x32xbf16, #tpu.memory_space<vmem>>, %arg2: memref<32x512xbf16, #tpu.memory_space<vmem>>, %arg3: memref<512x384xbf16, #tpu.memory_space<vmem>>, %arg4: memref<1x384xf32, #tpu.memory_space<vmem>>, %arg5: memref<8x1xf32, #tpu.memory_space<vmem>>) attributes {dimension_semantics = [#tpu.dimension_semantics<parallel>], iteration_bounds = array<i64: 1>, scalar_prefetch = 0 : i64, scratch_operands = 0 : i64, tpu.core_type = #tpu.core_type<tc>, window_params = [{transform_indices = @transform_0, window_bounds = array<i64: 8, 32>}, {pipeline_mode = #tpu.pipeline_mode<synchronous>, transform_indices = @transform_1, window_bounds = array<i64: 32, 512>}, {pipeline_mode = #tpu.pipeline_mode<synchronous>, transform_indices = @transform_2, window_bounds = array<i64: 512, 384>}, {pipeline_mode = #tpu.pipeline_mode<synchronous>, transform_indices = @transform_3, window_bounds = array<i64: 1, 384>}, {transform_indices = @transform_4, window_bounds = array<i64: 8, 1>}]} {
    %c0 = arith.constant 0 : index
    %c0_0 = arith.constant 0 : index
    %0 = vector.load %arg1[%c0, %c0_0] : memref<8x32xbf16, #tpu.memory_space<vmem>>, vector<8x32xbf16>
    %c0_1 = arith.constant 0 : index
    %c0_2 = arith.constant 0 : index
    %1 = vector.load %arg2[%c0_1, %c0_2] : memref<32x512xbf16, #tpu.memory_space<vmem>>, vector<32x512xbf16>
    %cst = arith.constant dense<0.000000e+00> : vector<8x512xf32>
    %2 = tpu.matmul %0, %1, %cst {dimension_numbers = #tpu.dot_dimension_numbers<[1], [0], [0], [1], [0, 0, 1, 1], [], []>} : vector<8x32xbf16>, vector<32x512xbf16>, vector<8x512xf32> -> vector<8x512xf32>
    %3 = arith.truncf %2 : vector<8x512xf32> to vector<8x512xbf16>
    %cst_3 = arith.constant 0.000000e+00 : bf16
    %4 = vector.broadcast %cst_3 : bf16 to vector<8x512xbf16>
    %5 = arith.maximumf %3, %4 : vector<8x512xbf16>
    %c0_4 = arith.constant 0 : index
    %c0_5 = arith.constant 0 : index
    %6 = vector.load %arg3[%c0_4, %c0_5] : memref<512x384xbf16, #tpu.memory_space<vmem>>, vector<512x384xbf16>
    %cst_6 = arith.constant dense<0.000000e+00> : vector<8x384xf32>
    %7 = tpu.matmul %5, %6, %cst_6 {dimension_numbers = #tpu.dot_dimension_numbers<[1], [0], [0], [1], [0, 0, 1, 1], [], []>} : vector<8x512xbf16>, vector<512x384xbf16>, vector<8x384xf32> -> vector<8x384xf32>
    %cst_7 = arith.constant 0.000000e+00 : f32
    %8 = vector.broadcast %cst_7 : f32 to vector<8x384xf32>
    %9 = arith.maximumf %7, %8 : vector<8x384xf32>
    %c0_8 = arith.constant 0 : index
    %c0_9 = arith.constant 0 : index
    %10 = vector.load %arg4[%c0_8, %c0_9] : memref<1x384xf32, #tpu.memory_space<vmem>>, vector<1x384xf32>
    %11 = vector.broadcast %10 : vector<1x384xf32> to vector<8x384xf32>
    %12 = arith.mulf %9, %11 : vector<8x384xf32>
    %cst_10 = arith.constant dense<0.000000e+00> : vector<8xf32>
    %13 = vector.multi_reduction <add>, %12, %cst_10 [1] : vector<8x384xf32> to vector<8xf32>
    %14 = vector.shape_cast %13 : vector<8xf32> to vector<8x1xf32>
    %c0_11 = arith.constant 0 : index
    %c0_12 = arith.constant 0 : index
    %15 = vector.load %arg5[%c0_11, %c0_12] : memref<8x1xf32, #tpu.memory_space<vmem>>, vector<8x1xf32>
    tpu.vector_store %arg5[%c0_11, %c0_12], %14 {strides = array<i32>} : memref<8x1xf32, #tpu.memory_space<vmem>>, vector<8x1xf32>,
    return
  }
  func.func @transform_0(%arg0: i32) -> (i32, i32) {
    %c0_i32 = arith.constant 0 : i32
    %c0_i32_0 = arith.constant 0 : i32
    return %arg0, %c0_i32 : i32, i32
  }
  func.func @transform_1(%arg0: i32) -> (i32, i32) {
    %c0_i32 = arith.constant 0 : i32
    %c0_i32_0 = arith.constant 0 : i32
    %c0_i32_1 = arith.constant 0 : i32
    return %c0_i32, %c0_i32_0 : i32, i32
  }
  func.func @transform_2(%arg0: i32) -> (i32, i32) {
    %c0_i32 = arith.constant 0 : i32
    %c0_i32_0 = arith.constant 0 : i32
    %c0_i32_1 = arith.constant 0 : i32
    return %c0_i32, %c0_i32_0 : i32, i32
  }
  func.func @transform_3(%arg0: i32) -> (i32, i32) {
    %c0_i32 = arith.constant 0 : i32
    %c0_i32_0 = arith.constant 0 : i32
    %c0_i32_1 = arith.constant 0 : i32
    return %c0_i32, %c0_i32_0 : i32, i32
  }
  func.func @transform_4(%arg0: i32) -> (i32, i32) {
    %c0_i32 = arith.constant 0 : i32
    %c0_i32_0 = arith.constant 0 : i32
    return %arg0, %c0_i32 : i32, i32
  }
}

</mosaic_0001>

<llo_original>
// kernel: tpu_custom_call.1
$region0: #{tpu_custom_call.1}
  #allocation0 [shape = 'u32[]', space=smem, size = 0x4, offset = 0x4, fixed_abs, tag = 'smem constant byte address 0x4 - core index']
  #allocation1 [shape = 'u32[72,128]{1,0:T(1,128)}', space=vmem, size = 0x9000, scoped, tag = 'internal scratch']
  %s0 = inlined_call_operand.hbm [shape: bf16[8,32], index: 0, kind: input, shape index: {}]
  %s1 = inlined_call_operand.hbm [shape: bf16[32,512], index: 1, kind: input, shape index: {}]
  %s2 = inlined_call_operand.hbm [shape: bf16[512,384], index: 2, kind: input, shape index: {}]
  %s3 = inlined_call_operand.hbm [shape: f32[1,384], index: 3, kind: input, shape index: {}]
  %s4 = inlined_call_operand.vmem [shape: f32[8,1], index: 4, kind: output, shape index: {}]
  %s5 = sld [smem:[#allocation0]]
  $region42: #{tpu_custom_call.1} parent=0
    _
  %s7 = ssub.s32 1, %s5
  %s8 = scalar_select 0, %s7, %s5
  $region1: #{tpu_custom_call.1} parent=0
    #allocation2 [shape = 'u8[2048]{0}', space=vmem, size = 0x800, scoped, tag = 'input window, operand 0, single buffered']
    #allocation3 [shape = 's32[1]{0}', space=sflag, size = 0x4, scoped, tag = 'scoped memory for tpu_custom_call.1']
    #allocation4 [shape = 'u8[32768]{0}', space=vmem, size = 0x8000, scoped, tag = 'input window, operand 1, single buffered']
    #allocation5 [shape = 's32[1]{0}', space=sflag, size = 0x4, scoped, tag = 'scoped memory for tpu_custom_call.1']
    #allocation6 [shape = 'u8[393216]{0}', space=vmem, size = 0x60000, scoped, tag = 'input window, operand 2, single buffered']
    #allocation7 [shape = 'u8[1536]{0}', space=vmem, size = 0x800, scoped, tag = 'input window, operand 3, single buffered']
    #allocation8 [shape = 's32[1]{0}', space=sflag, size = 0x4, scoped, tag = 'scoped memory for tpu_custom_call.1']
    %9 = vsyncpa [#allocation3], 0
    %10 = vsyncpa [#allocation5], 0
    %11 = vsyncpa [#allocation8], 0
    // Predicated region
    $region2: #{tpu_custom_call.1} parent=1 // pred_check
      _
    $region3: #{tpu_custom_call.1} parent=1 // pred_check_branch
      %13 = sbr.rel (0) target = $region5
    $region4: #{tpu_custom_call.1} parent=1 // pred_region
      %15 = vsyncadd [#allocation3], 0
      %s17 = sshll.u32 %s0, 4
      %s18 = int_to_ptr.hbm [resolvable:$true] %s17
      %s19 = sshll.u32 [#allocation2], 4
      %s20 = int_to_ptr.vmem [resolvable:$true] %s19
      %22 = dma.hbm_to_vmem [thread:$0]  %s18, 64, %s20, [#allocation3]
    $region5: #{tpu_custom_call.1} parent=1 // pred_fallthru
      _
    // Predicated region
    $region6: #{tpu_custom_call.1} parent=1 // pred_check
      _
    $region7: #{tpu_custom_call.1} parent=1 // pred_check_branch
      %24 = sbr.rel (0) target = $region9
    $region8: #{tpu_custom_call.1} parent=1 // pred_region
      %26 = vsyncadd [#allocation5], 0
      %s27 = sshll.u32 %s1, 4
      %s28 = int_to_ptr.hbm [resolvable:$true] %s27
      %s29 = sshll.u32 [#allocation4], 4
      %s30 = int_to_ptr.vmem [resolvable:$true] %s29
      %35 = dma.hbm_to_vmem [thread:$0]  %s28, 1024, %s30, [#allocation5], 256, 256, 16
    $region9: #{tpu_custom_call.1} parent=1 // pred_fallthru
      _
    // Predicated region
    $region10: #{tpu_custom_call.1} parent=1 // pred_check
      _
    $region11: #{tpu_custom_call.1} parent=1 // pred_check_branch
      %37 = sbr.rel (0) target = $region13
    $region12: #{tpu_custom_call.1} parent=1 // pred_region
      %39 = vsyncadd [#allocation5], 0
      %s40 = sshll.u32 %s2, 4
      %s41 = int_to_ptr.hbm [resolvable:$true] %s40
      %s42 = sshll.u32 [#allocation6], 4
      %s43 = int_to_ptr.vmem [resolvable:$true] %s42
      %48 = dma.hbm_to_vmem [thread:$0]  %s41, 12288, %s43, [#allocation5], 192, 192, 12
    $region13: #{tpu_custom_call.1} parent=1 // pred_fallthru
      _
    // Predicated region
    $region14: #{tpu_custom_call.1} parent=1 // pred_check
      _
    $region15: #{tpu_custom_call.1} parent=1 // pred_check_branch
      %50 = sbr.rel (0) target = $region17
    $region16: #{tpu_custom_call.1} parent=1 // pred_region
      %52 = vsyncadd [#allocation8], 0
      %s54 = sshll.u32 %s3, 4
      %s55 = int_to_ptr.hbm [resolvable:$true] %s54
      %s56 = sshll.u32 [#allocation7], 4
      %s57 = int_to_ptr.vmem [resolvable:$true] %s56
      %59 = dma.hbm_to_vmem [thread:$0]  %s55, 48, %s57, [#allocation8]
    $region17: #{tpu_custom_call.1} parent=1 // pred_fallthru
      _
    // Predicated region
    $region18: #{tpu_custom_call.1} parent=1 // pred_check
      _
    $region19: #{tpu_custom_call.1} parent=1 // pred_check_branch
      %61 = sbr.rel (0) target = $region21
    $region20: #{tpu_custom_call.1} parent=1 // pred_region
      %63 = dma.done [#allocation3], 64
    $region21: #{tpu_custom_call.1} parent=1 // pred_fallthru
      _
    // Predicated region
    $region22: #{tpu_custom_call.1} parent=1 // pred_check
      _
    $region23: #{tpu_custom_call.1} parent=1 // pred_check_branch
      %65 = sbr.rel (0) target = $region25
    $region24: #{tpu_custom_call.1} parent=1 // pred_region
      %67 = dma.done [#allocation5], 1024
    $region25: #{tpu_custom_call.1} parent=1 // pred_fallthru
      _
    // Predicated region
    $region26: #{tpu_custom_call.1} parent=1 // pred_check
      _
    $region27: #{tpu_custom_call.1} parent=1 // pred_check_branch
      %69 = sbr.rel (0) target = $region29
    $region28: #{tpu_custom_call.1} parent=1 // pred_region
      %71 = dma.done [#allocation5], 12288
    $region29: #{tpu_custom_call.1} parent=1 // pred_fallthru
      _
    // Predicated region
    $region30: #{tpu_custom_call.1} parent=1 // pred_check
      _
    $region31: #{tpu_custom_call.1} parent=1 // pred_check_branch
      %73 = sbr.rel (0) target = $region33
    $region32: #{tpu_custom_call.1} parent=1 // pred_region
      %75 = dma.done [#allocation8], 48
    $region33: #{tpu_custom_call.1} parent=1 // pred_fallthru
      _
    %v77 = vld [vmem:[#allocation2] sm:$0xf]
    %v78 = vld [vmem:[#allocation4] sm:$0xff]
    %v79 = vld [vmem:[#allocation4 + $0x8] sm:$0xff]
    %v80 = vld [vmem:[#allocation4 + $0x10] sm:$0xff]
    %v81 = vld [vmem:[#allocation4 + $0x18] sm:$0xff]
    %v82 = vld [vmem:[#allocation4 + $0x20] sm:$0xff]
    %v83 = vld [vmem:[#allocation4 + $0x28] sm:$0xff]
    %v84 = vld [vmem:[#allocation4 + $0x30] sm:$0xff]
    %v85 = vld [vmem:[#allocation4 + $0x38] sm:$0xff]
    %v94 = vunpack.c.l.b16 %v78
    %v95 = vunpack.c.h.b16 %v78
    %v96 = vunpack.c.l.b16 %v79
    %v97 = vunpack.c.h.b16 %v79
    %v98 = vunpack.c.l.b16 %v80
    %v99 = vunpack.c.h.b16 %v80
    %v100 = vunpack.c.l.b16 %v81
    %v101 = vunpack.c.h.b16 %v81
    %v102 = vunpack.c.l.b16 %v82
    %v103 = vunpack.c.h.b16 %v82
    %v104 = vunpack.c.l.b16 %v83
    %v105 = vunpack.c.h.b16 %v83
    %v106 = vunpack.c.l.b16 %v84
    %v107 = vunpack.c.h.b16 %v84
    %v108 = vunpack.c.l.b16 %v85
    %v109 = vunpack.c.h.b16 %v85
    %v110 = vpack.c.b16 %v98, %v94
    %v111 = vpack.c.b16 %v99, %v95
    %v112 = vpack.c.b16 %v100, %v96
    %v113 = vpack.c.b16 %v101, %v97
    %v114 = vpack.c.b16 %v106, %v102
    %v115 = vpack.c.b16 %v107, %v103
    %v116 = vpack.c.b16 %v108, %v104
    %v117 = vpack.c.b16 %v109, %v105
    %vm126 = vcmask 261120
    %v128 = vsel %vm126, %v77, 0
    %130 = vmatpush.bf16.msra.mxu0 0
    %131 = vmatpush.bf16.msra.mxu0 0
    %132 = vmatpush.bf16.msra.mxu0 0
    %133 = vmatpush.bf16.msra.mxu0 0
    %134 = vmatpush.bf16.msra.mxu0 0
    %135 = vmatpush.bf16.msra.mxu0 0
    %136 = vmatpush.bf16.msra.mxu0 %v114
    %137 = vmatpush.bf16.msra.mxu0 %v110
    %138 = vmatmul.bf16.gmra.mxu0 %v128
    %v139 = vpop.f32.mrf.mxu0
    %v140 = vadd.f32 0.0, %v139
    %v141 = vpop.f32.mrf.mxu0
    %142 = vdwg.mxu0
    %143 = vmatpush.bf16.msra.mxu0 0
    %144 = vmatpush.bf16.msra.mxu0 0
    %145 = vmatpush.bf16.msra.mxu0 0
    %146 = vmatpush.bf16.msra.mxu0 0
    %147 = vmatpush.bf16.msra.mxu0 0
    %148 = vmatpush.bf16.msra.mxu0 0
    %149 = vmatpush.bf16.msra.mxu0 %v115
    %150 = vmatpush.bf16.msra.mxu0 %v111
    %151 = vmatmul.bf16.gmra.mxu0 %v128
    %v152 = vpop.f32.mrf.mxu0
    %v153 = vadd.f32 0.0, %v152
    %v154 = vpop.f32.mrf.mxu0
    %155 = vdwg.mxu0
    %156 = vmatpush.bf16.msra.mxu0 0
    %157 = vmatpush.bf16.msra.mxu0 0
    %158 = vmatpush.bf16.msra.mxu0 0
    %159 = vmatpush.bf16.msra.mxu0 0
    %160 = vmatpush.bf16.msra.mxu0 0
    %161 = vmatpush.bf16.msra.mxu0 0
    %162 = vmatpush.bf16.msra.mxu0 %v116
    %163 = vmatpush.bf16.msra.mxu0 %v112
    %164 = vmatmul.bf16.gmra.mxu0 %v128
    %v165 = vpop.f32.mrf.mxu0
    %v166 = vadd.f32 0.0, %v165
    %v167 = vpop.f32.mrf.mxu0
    %168 = vdwg.mxu0
    %169 = vmatpush.bf16.msra.mxu0 0
    %170 = vmatpush.bf16.msra.mxu0 0
    %171 = vmatpush.bf16.msra.mxu0 0
    %172 = vmatpush.bf16.msra.mxu0 0
    %173 = vmatpush.bf16.msra.mxu0 0
    %174 = vmatpush.bf16.msra.mxu0 0
    %175 = vmatpush.bf16.msra.mxu0 %v117
    %176 = vmatpush.bf16.msra.mxu0 %v113
    %177 = vmatmul.bf16.gmra.mxu0 %v128
    %v178 = vpop.f32.mrf.mxu0
    %v179 = vadd.f32 0.0, %v178
    %v180 = vpop.f32.mrf.mxu0
    %181 = vdwg.mxu0
    %v182 = vpack.c.bf16 %v153, %v140
    %v183 = vpack.c.bf16 %v179, %v166
    %v184 = vunpack.c.l.bf16 %v182
    %v185 = vunpack.c.h.bf16 %v182
    %v186 = vunpack.c.l.bf16 %v183
    %v187 = vunpack.c.h.bf16 %v183
    %v188 = vmax.f32 %v184, 0.0
    %v189 = vmax.f32 %v185, 0.0
    %v190 = vmax.f32 %v186, 0.0
    %v191 = vmax.f32 %v187, 0.0
    %v192 = vpack.c.bf16 %v188, %v188
    %v193 = vpack.c.bf16 %v189, %v189
    %v194 = vpack.c.bf16 %v190, %v190
    %v195 = vpack.c.bf16 %v191, %v191
    %v196 = vld [vmem:[#allocation6] sm:$0xff]
    %v197 = vld [vmem:[#allocation6 + $0x8] sm:$0xf]
    %v198 = vld [vmem:[#allocation6 + $0xc] sm:$0xff]
    %v199 = vld [vmem:[#allocation6 + $0x14] sm:$0xf]
    %v200 = vld [vmem:[#allocation6 + $0x18] sm:$0xff]
    %v201 = vld [vmem:[#allocation6 + $0x20] sm:$0xf]
    %v202 = vld [vmem:[#allocation6 + $0x24] sm:$0xff]
    %v203 = vld [vmem:[#allocation6 + $0x2c] sm:$0xf]
    %v204 = vld [vmem:[#allocation6 + $0x30] sm:$0xff]
    %v205 = vld [vmem:[#allocation6 + $0x38] sm:$0xf]
    %v206 = vld [vmem:[#allocation6 + $0x3c] sm:$0xff]
    %v207 = vld [vmem:[#allocation6 + $0x44] sm:$0xf]
    %v208 = vld [vmem:[#allocation6 + $0x48] sm:$0xff]
    %v209 = vld [vmem:[#allocation6 + $0x50] sm:$0xf]
    %v210 = vld [vmem:[#allocation6 + $0x54] sm:$0xff]
    %v211 = vld [vmem:[#allocation6 + $0x5c] sm:$0xf]
    %v212 = vld [vmem:[#allocation6 + $0x60] sm:$0xff]
    %v213 = vld [vmem:[#allocation6 + $0x68] sm:$0xf]
    %v214 = vld [vmem:[#allocation6 + $0x6c] sm:$0xff]
    %v215 = vld [vmem:[#allocation6 + $0x74] sm:$0xf]
    %v216 = vld [vmem:[#allocation6 + $0x78] sm:$0xff]
    %v217 = vld [vmem:[#allocation6 + $0x80] sm:$0xf]
    %v218 = vld [vmem:[#allocation6 + $0x84] sm:$0xff]
    %v219 = vld [vmem:[#allocation6 + $0x8c] sm:$0xf]
    %v220 = vld [vmem:[#allocation6 + $0x90] sm:$0xff]
    %v221 = vld [vmem:[#allocation6 + $0x98] sm:$0xf]
    %v222 = vld [vmem:[#allocation6 + $0x9c] sm:$0xff]
    %v223 = vld [vmem:[#allocation6 + $0xa4] sm:$0xf]
    %v224 = vld [vmem:[#allocation6 + $0xa8] sm:$0xff]
    %v225 = vld [vmem:[#allocation6 + $0xb0] sm:$0xf]
    %v226 = vld [vmem:[#allocation6 + $0xb4] sm:$0xff]
    %v227 = vld [vmem:[#allocation6 + $0xbc] sm:$0xf]
    %v228 = vld [vmem:[#allocation6 + $0xc0] sm:$0xff]
    %v229 = vld [vmem:[#allocation6 + $0xc8] sm:$0xf]
    %v230 = vld [vmem:[#allocation6 + $0xcc] sm:$0xff]
    %v231 = vld [vmem:[#allocation6 + $0xd4] sm:$0xf]
    %v232 = vld [vmem:[#allocation6 + $0xd8] sm:$0xff]
    %v233 = vld [vmem:[#allocation6 + $0xe0] sm:$0xf]
    %v234 = vld [vmem:[#allocation6 + $0xe4] sm:$0xff]
    %v235 = vld [vmem:[#allocation6 + $0xec] sm:$0xf]
    %v236 = vld [vmem:[#allocation6 + $0xf0] sm:$0xff]
    %v237 = vld [vmem:[#allocation6 + $0xf8] sm:$0xf]
    %v238 = vld [vmem:[#allocation6 + $0xfc] sm:$0xff]
    %v239 = vld [vmem:[#allocation6 + $0x104] sm:$0xf]
    %v240 = vld [vmem:[#allocation6 + $0x108] sm:$0xff]
    %v241 = vld [vmem:[#allocation6 + $0x110] sm:$0xf]
    %v242 = vld [vmem:[#allocation6 + $0x114] sm:$0xff]
    %v243 = vld [vmem:[#allocation6 + $0x11c] sm:$0xf]
    %v244 = vld [vmem:[#allocation6 + $0x120] sm:$0xff]
    %v245 = vld [vmem:[#allocation6 + $0x128] sm:$0xf]
    %v246 = vld [vmem:[#allocation6 + $0x12c] sm:$0xff]
    %v247 = vld [vmem:[#allocation6 + $0x134] sm:$0xf]
    %v248 = vld [vmem:[#allocation6 + $0x138] sm:$0xff]
    %v249 = vld [vmem:[#allocation6 + $0x140] sm:$0xf]
    %v250 = vld [vmem:[#allocation6 + $0x144] sm:$0xff]
    %v251 = vld [vmem:[#allocation6 + $0x14c] sm:$0xf]
    %v252 = vld [vmem:[#allocation6 + $0x150] sm:$0xff]
    %v253 = vld [vmem:[#allocation6 + $0x158] sm:$0xf]
    %v254 = vld [vmem:[#allocation6 + $0x15c] sm:$0xff]
    %v255 = vld [vmem:[#allocation6 + $0x164] sm:$0xf]
    %v256 = vld [vmem:[#allocation6 + $0x168] sm:$0xff]
    %v257 = vld [vmem:[#allocation6 + $0x170] sm:$0xf]
    %v258 = vld [vmem:[#allocation6 + $0x174] sm:$0xff]
    %v259 = vld [vmem:[#allocation6 + $0x17c] sm:$0xf]
    %v260 = vld [vmem:[#allocation6 + $0x180] sm:$0xff]
    %v261 = vld [vmem:[#allocation6 + $0x188] sm:$0xf]
    %v262 = vld [vmem:[#allocation6 + $0x18c] sm:$0xff]
    %v263 = vld [vmem:[#allocation6 + $0x194] sm:$0xf]
    %v264 = vld [vmem:[#allocation6 + $0x198] sm:$0xff]
    %v265 = vld [vmem:[#allocation6 + $0x1a0] sm:$0xf]
    %v266 = vld [vmem:[#allocation6 + $0x1a4] sm:$0xff]
    %v267 = vld [vmem:[#allocation6 + $0x1ac] sm:$0xf]
    %v268 = vld [vmem:[#allocation6 + $0x1b0] sm:$0xff]
    %v269 = vld [vmem:[#allocation6 + $0x1b8] sm:$0xf]
    %v270 = vld [vmem:[#allocation6 + $0x1bc] sm:$0xff]
    %v271 = vld [vmem:[#allocation6 + $0x1c4] sm:$0xf]
    %v272 = vld [vmem:[#allocation6 + $0x1c8] sm:$0xff]
    %v273 = vld [vmem:[#allocation6 + $0x1d0] sm:$0xf]
    %v274 = vld [vmem:[#allocation6 + $0x1d4] sm:$0xff]
    %v275 = vld [vmem:[#allocation6 + $0x1dc] sm:$0xf]
    %v276 = vld [vmem:[#allocation6 + $0x1e0] sm:$0xff]
    %v277 = vld [vmem:[#allocation6 + $0x1e8] sm:$0xf]
    %v278 = vld [vmem:[#allocation6 + $0x1ec] sm:$0xff]
    %v279 = vld [vmem:[#allocation6 + $0x1f4] sm:$0xf]
    %v280 = vld [vmem:[#allocation6 + $0x1f8] sm:$0xff]
    %v281 = vld [vmem:[#allocation6 + $0x200] sm:$0xf]
    %v282 = vld [vmem:[#allocation6 + $0x204] sm:$0xff]
    %v283 = vld [vmem:[#allocation6 + $0x20c] sm:$0xf]
    %v284 = vld [vmem:[#allocation6 + $0x210] sm:$0xff]
    %v285 = vld [vmem:[#allocation6 + $0x218] sm:$0xf]
    %v286 = vld [vmem:[#allocation6 + $0x21c] sm:$0xff]
    %v287 = vld [vmem:[#allocation6 + $0x224] sm:$0xf]
    %v288 = vld [vmem:[#allocation6 + $0x228] sm:$0xff]
    %v289 = vld [vmem:[#allocation6 + $0x230] sm:$0xf]
    %v290 = vld [vmem:[#allocation6 + $0x234] sm:$0xff]
    %v291 = vld [vmem:[#allocation6 + $0x23c] sm:$0xf]
    %v292 = vld [vmem:[#allocation6 + $0x240] sm:$0xff]
    %v293 = vld [vmem:[#allocation6 + $0x248] sm:$0xf]
    %v294 = vld [vmem:[#allocation6 + $0x24c] sm:$0xff]
    %v295 = vld [vmem:[#allocation6 + $0x254] sm:$0xf]
    %v296 = vld [vmem:[#allocation6 + $0x258] sm:$0xff]
    %v297 = vld [vmem:[#allocation6 + $0x260] sm:$0xf]
    %v298 = vld [vmem:[#allocation6 + $0x264] sm:$0xff]
    %v299 = vld [vmem:[#allocation6 + $0x26c] sm:$0xf]
    %v300 = vld [vmem:[#allocation6 + $0x270] sm:$0xff]
    %v301 = vld [vmem:[#allocation6 + $0x278] sm:$0xf]
    %v302 = vld [vmem:[#allocation6 + $0x27c] sm:$0xff]
    %v303 = vld [vmem:[#allocation6 + $0x284] sm:$0xf]
    %v304 = vld [vmem:[#allocation6 + $0x288] sm:$0xff]
    %v305 = vld [vmem:[#allocation6 + $0x290] sm:$0xf]
    %v306 = vld [vmem:[#allocation6 + $0x294] sm:$0xff]
    %v307 = vld [vmem:[#allocation6 + $0x29c] sm:$0xf]
    %v308 = vld [vmem:[#allocation6 + $0x2a0] sm:$0xff]
    %v309 = vld [vmem:[#allocation6 + $0x2a8] sm:$0xf]
    %v310 = vld [vmem:[#allocation6 + $0x2ac] sm:$0xff]
    %v311 = vld [vmem:[#allocation6 + $0x2b4] sm:$0xf]
    %v312 = vld [vmem:[#allocation6 + $0x2b8] sm:$0xff]
    %v313 = vld [vmem:[#allocation6 + $0x2c0] sm:$0xf]
    %v314 = vld [vmem:[#allocation6 + $0x2c4] sm:$0xff]
    %v315 = vld [vmem:[#allocation6 + $0x2cc] sm:$0xf]
    %v316 = vld [vmem:[#allocation6 + $0x2d0] sm:$0xff]
    %v317 = vld [vmem:[#allocation6 + $0x2d8] sm:$0xf]
    %v318 = vld [vmem:[#allocation6 + $0x2dc] sm:$0xff]
    %v319 = vld [vmem:[#allocation6 + $0x2e4] sm:$0xf]
    %v320 = vld [vmem:[#allocation6 + $0x2e8] sm:$0xff]
    %v321 = vld [vmem:[#allocation6 + $0x2f0] sm:$0xf]
    %v322 = vld [vmem:[#allocation6 + $0x2f4] sm:$0xff]
    %v323 = vld [vmem:[#allocation6 + $0x2fc] sm:$0xf]
    %v452 = vunpack.c.l.b16 %v196
    %v453 = vunpack.c.h.b16 %v196
    %v454 = vunpack.c.l.b16 %v197
    %v455 = vunpack.c.l.b16 %v198
    %v456 = vunpack.c.h.b16 %v198
    %v457 = vunpack.c.l.b16 %v199
    %v458 = vunpack.c.l.b16 %v200
    %v459 = vunpack.c.h.b16 %v200
    %v460 = vunpack.c.l.b16 %v201
    %v461 = vunpack.c.l.b16 %v202
    %v462 = vunpack.c.h.b16 %v202
    %v463 = vunpack.c.l.b16 %v203
    %v464 = vunpack.c.l.b16 %v204
    %v465 = vunpack.c.h.b16 %v204
    %v466 = vunpack.c.l.b16 %v205
    %v467 = vunpack.c.l.b16 %v206
    %v468 = vunpack.c.h.b16 %v206
    %v469 = vunpack.c.l.b16 %v207
    %v470 = vunpack.c.l.b16 %v208
    %v471 = vunpack.c.h.b16 %v208
    %v472 = vunpack.c.l.b16 %v209
    %v473 = vunpack.c.l.b16 %v210
    %v474 = vunpack.c.h.b16 %v210
    %v475 = vunpack.c.l.b16 %v211
    %v476 = vunpack.c.l.b16 %v212
    %v477 = vunpack.c.h.b16 %v212
    %v478 = vunpack.c.l.b16 %v213
    %v479 = vunpack.c.l.b16 %v214
    %v480 = vunpack.c.h.b16 %v214
    %v481 = vunpack.c.l.b16 %v215
    %v482 = vunpack.c.l.b16 %v216
    %v483 = vunpack.c.h.b16 %v216
    %v484 = vunpack.c.l.b16 %v217
    %v485 = vunpack.c.l.b16 %v218
    %v486 = vunpack.c.h.b16 %v218
    %v487 = vunpack.c.l.b16 %v219
    %v488 = vunpack.c.l.b16 %v220
    %v489 = vunpack.c.h.b16 %v220
    %v490 = vunpack.c.l.b16 %v221
    %v491 = vunpack.c.l.b16 %v222
    %v492 = vunpack.c.h.b16 %v222
    %v493 = vunpack.c.l.b16 %v223
    %v494 = vunpack.c.l.b16 %v224
    %v495 = vunpack.c.h.b16 %v224
    %v496 = vunpack.c.l.b16 %v225
    %v497 = vunpack.c.l.b16 %v226
    %v498 = vunpack.c.h.b16 %v226
    %v499 = vunpack.c.l.b16 %v227
    %v500 = vunpack.c.l.b16 %v228
    %v501 = vunpack.c.h.b16 %v228
    %v502 = vunpack.c.l.b16 %v229
    %v503 = vunpack.c.l.b16 %v230
    %v504 = vunpack.c.h.b16 %v230
    %v505 = vunpack.c.l.b16 %v231
    %v506 = vunpack.c.l.b16 %v232
    %v507 = vunpack.c.h.b16 %v232
    %v508 = vunpack.c.l.b16 %v233
    %v509 = vunpack.c.l.b16 %v234
    %v510 = vunpack.c.h.b16 %v234
    %v511 = vunpack.c.l.b16 %v235
    %v512 = vunpack.c.l.b16 %v236
    %v513 = vunpack.c.h.b16 %v236
    %v514 = vunpack.c.l.b16 %v237
    %v515 = vunpack.c.l.b16 %v238
    %v516 = vunpack.c.h.b16 %v238
    %v517 = vunpack.c.l.b16 %v239
    %v518 = vunpack.c.l.b16 %v240
    %v519 = vunpack.c.h.b16 %v240
    %v520 = vunpack.c.l.b16 %v241
    %v521 = vunpack.c.l.b16 %v242
    %v522 = vunpack.c.h.b16 %v242
    %v523 = vunpack.c.l.b16 %v243
    %v524 = vunpack.c.l.b16 %v244
    %v525 = vunpack.c.h.b16 %v244
    %v526 = vunpack.c.l.b16 %v245
    %v527 = vunpack.c.l.b16 %v246
    %v528 = vunpack.c.h.b16 %v246
    %v529 = vunpack.c.l.b16 %v247
    %v530 = vunpack.c.l.b16 %v248
    %v531 = vunpack.c.h.b16 %v248
    %v532 = vunpack.c.l.b16 %v249
    %v533 = vunpack.c.l.b16 %v250
    %v534 = vunpack.c.h.b16 %v250
    %v535 = vunpack.c.l.b16 %v251
    %v536 = vunpack.c.l.b16 %v252
    %v537 = vunpack.c.h.b16 %v252
    %v538 = vunpack.c.l.b16 %v253
    %v539 = vunpack.c.l.b16 %v254
    %v540 = vunpack.c.h.b16 %v254
    %v541 = vunpack.c.l.b16 %v255
    %v542 = vunpack.c.l.b16 %v256
    %v543 = vunpack.c.h.b16 %v256
    %v544 = vunpack.c.l.b16 %v257
    %v545 = vunpack.c.l.b16 %v258
    %v546 = vunpack.c.h.b16 %v258
    %v547 = vunpack.c.l.b16 %v259
    %v548 = vunpack.c.l.b16 %v260
    %v549 = vunpack.c.h.b16 %v260
    %v550 = vunpack.c.l.b16 %v261
    %v551 = vunpack.c.l.b16 %v262
    %v552 = vunpack.c.h.b16 %v262
    %v553 = vunpack.c.l.b16 %v263
    %v554 = vunpack.c.l.b16 %v264
    %v555 = vunpack.c.h.b16 %v264
    %v556 = vunpack.c.l.b16 %v265
    %v557 = vunpack.c.l.b16 %v266
    %v558 = vunpack.c.h.b16 %v266
    %v559 = vunpack.c.l.b16 %v267
    %v560 = vunpack.c.l.b16 %v268
    %v561 = vunpack.c.h.b16 %v268
    %v562 = vunpack.c.l.b16 %v269
    %v563 = vunpack.c.l.b16 %v270
    %v564 = vunpack.c.h.b16 %v270
    %v565 = vunpack.c.l.b16 %v271
    %v566 = vunpack.c.l.b16 %v272
    %v567 = vunpack.c.h.b16 %v272
    %v568 = vunpack.c.l.b16 %v273
    %v569 = vunpack.c.l.b16 %v274
    %v570 = vunpack.c.h.b16 %v274
    %v571 = vunpack.c.l.b16 %v275
    %v572 = vunpack.c.l.b16 %v276
    %v573 = vunpack.c.h.b16 %v276
    %v574 = vunpack.c.l.b16 %v277
    %v575 = vunpack.c.l.b16 %v278
    %v576 = vunpack.c.h.b16 %v278
    %v577 = vunpack.c.l.b16 %v279
    %v578 = vunpack.c.l.b16 %v280
    %v579 = vunpack.c.h.b16 %v280
    %v580 = vunpack.c.l.b16 %v281
    %v581 = vunpack.c.l.b16 %v282
    %v582 = vunpack.c.h.b16 %v282
    %v583 = vunpack.c.l.b16 %v283
    %v584 = vunpack.c.l.b16 %v284
    %v585 = vunpack.c.h.b16 %v284
    %v586 = vunpack.c.l.b16 %v285
    %v587 = vunpack.c.l.b16 %v286
    %v588 = vunpack.c.h.b16 %v286
    %v589 = vunpack.c.l.b16 %v287
    %v590 = vunpack.c.l.b16 %v288
    %v591 = vunpack.c.h.b16 %v288
    %v592 = vunpack.c.l.b16 %v289
    %v593 = vunpack.c.l.b16 %v290
    %v594 = vunpack.c.h.b16 %v290
    %v595 = vunpack.c.l.b16 %v291
    %v596 = vunpack.c.l.b16 %v292
    %v597 = vunpack.c.h.b16 %v292
    %v598 = vunpack.c.l.b16 %v293
    %v599 = vunpack.c.l.b16 %v294
    %v600 = vunpack.c.h.b16 %v294
    %v601 = vunpack.c.l.b16 %v295
    %v602 = vunpack.c.l.b16 %v296
    %v603 = vunpack.c.h.b16 %v296
    %v604 = vunpack.c.l.b16 %v297
    %v605 = vunpack.c.l.b16 %v298
    %v606 = vunpack.c.h.b16 %v298
    %v607 = vunpack.c.l.b16 %v299
    %v608 = vunpack.c.l.b16 %v300
    %v609 = vunpack.c.h.b16 %v300
    %v610 = vunpack.c.l.b16 %v301
    %v611 = vunpack.c.l.b16 %v302
    %v612 = vunpack.c.h.b16 %v302
    %v613 = vunpack.c.l.b16 %v303
    %v614 = vunpack.c.l.b16 %v304
    %v615 = vunpack.c.h.b16 %v304
    %v616 = vunpack.c.l.b16 %v305
    %v617 = vunpack.c.l.b16 %v306
    %v618 = vunpack.c.h.b16 %v306
    %v619 = vunpack.c.l.b16 %v307
    %v620 = vunpack.c.l.b16 %v308
    %v621 = vunpack.c.h.b16 %v308
    %v622 = vunpack.c.l.b16 %v309
    %v623 = vunpack.c.l.b16 %v310
    %v624 = vunpack.c.h.b16 %v310
    %v625 = vunpack.c.l.b16 %v311
    %v626 = vunpack.c.l.b16 %v312
    %v627 = vunpack.c.h.b16 %v312
    %v628 = vunpack.c.l.b16 %v313
    %v629 = vunpack.c.l.b16 %v314
    %v630 = vunpack.c.h.b16 %v314
    %v631 = vunpack.c.l.b16 %v315
    %v632 = vunpack.c.l.b16 %v316
    %v633 = vunpack.c.h.b16 %v316
    %v634 = vunpack.c.l.b16 %v317
    %v635 = vunpack.c.l.b16 %v318
    %v636 = vunpack.c.h.b16 %v318
    %v637 = vunpack.c.l.b16 %v319
    %v638 = vunpack.c.l.b16 %v320
    %v639 = vunpack.c.h.b16 %v320
    %v640 = vunpack.c.l.b16 %v321
    %v641 = vunpack.c.l.b16 %v322
    %v642 = vunpack.c.h.b16 %v322
    %v643 = vunpack.c.l.b16 %v323
    %v644 = vpack.c.b16 %v455, %v452
    %v645 = vpack.c.b16 %v456, %v453
    %v646 = vpack.c.b16 %v457, %v454
    %v647 = vpack.c.b16 %v461, %v458
    %v648 = vpack.c.b16 %v462, %v459
    %v649 = vpack.c.b16 %v463, %v460
    %v650 = vpack.c.b16 %v467, %v464
    %v651 = vpack.c.b16 %v468, %v465
    %v652 = vpack.c.b16 %v469, %v466
    %v653 = vpack.c.b16 %v473, %v470
    %v654 = vpack.c.b16 %v474, %v471
    %v655 = vpack.c.b16 %v475, %v472
    %v656 = vpack.c.b16 %v479, %v476
    %v657 = vpack.c.b16 %v480, %v477
    %v658 = vpack.c.b16 %v481, %v478
    %v659 = vpack.c.b16 %v485, %v482
    %v660 = vpack.c.b16 %v486, %v483
    %v661 = vpack.c.b16 %v487, %v484
    %v662 = vpack.c.b16 %v491, %v488
    %v663 = vpack.c.b16 %v492, %v489
    %v664 = vpack.c.b16 %v493, %v490
    %v665 = vpack.c.b16 %v497, %v494
    %v666 = vpack.c.b16 %v498, %v495
    %v667 = vpack.c.b16 %v499, %v496
    %v668 = vpack.c.b16 %v503, %v500
    %v669 = vpack.c.b16 %v504, %v501
    %v670 = vpack.c.b16 %v505, %v502
    %v671 = vpack.c.b16 %v509, %v506
    %v672 = vpack.c.b16 %v510, %v507
    %v673 = vpack.c.b16 %v511, %v508
    %v674 = vpack.c.b16 %v515, %v512
    %v675 = vpack.c.b16 %v516, %v513
    %v676 = vpack.c.b16 %v517, %v514
    %v677 = vpack.c.b16 %v521, %v518
    %v678 = vpack.c.b16 %v522, %v519
    %v679 = vpack.c.b16 %v523, %v520
    %v680 = vpack.c.b16 %v527, %v524
    %v681 = vpack.c.b16 %v528, %v525
    %v682 = vpack.c.b16 %v529, %v526
    %v683 = vpack.c.b16 %v533, %v530
    %v684 = vpack.c.b16 %v534, %v531
    %v685 = vpack.c.b16 %v535, %v532
    %v686 = vpack.c.b16 %v539, %v536
    %v687 = vpack.c.b16 %v540, %v537
    %v688 = vpack.c.b16 %v541, %v538
    %v689 = vpack.c.b16 %v545, %v542
    %v690 = vpack.c.b16 %v546, %v543
    %v691 = vpack.c.b16 %v547, %v544
    %v692 = vpack.c.b16 %v551, %v548
    %v693 = vpack.c.b16 %v552, %v549
    %v694 = vpack.c.b16 %v553, %v550
    %v695 = vpack.c.b16 %v557, %v554
    %v696 = vpack.c.b16 %v558, %v555
    %v697 = vpack.c.b16 %v559, %v556
    %v698 = vpack.c.b16 %v563, %v560
    %v699 = vpack.c.b16 %v564, %v561
    %v700 = vpack.c.b16 %v565, %v562
    %v701 = vpack.c.b16 %v569, %v566
    %v702 = vpack.c.b16 %v570, %v567
    %v703 = vpack.c.b16 %v571, %v568
    %v704 = vpack.c.b16 %v575, %v572
    %v705 = vpack.c.b16 %v576, %v573
    %v706 = vpack.c.b16 %v577, %v574
    %v707 = vpack.c.b16 %v581, %v578
    %v708 = vpack.c.b16 %v582, %v579
    %v709 = vpack.c.b16 %v583, %v580
    %v710 = vpack.c.b16 %v587, %v584
    %v711 = vpack.c.b16 %v588, %v585
    %v712 = vpack.c.b16 %v589, %v586
    %v713 = vpack.c.b16 %v593, %v590
    %v714 = vpack.c.b16 %v594, %v591
    %v715 = vpack.c.b16 %v595, %v592
    %v716 = vpack.c.b16 %v599, %v596
    %v717 = vpack.c.b16 %v600, %v597
    %v718 = vpack.c.b16 %v601, %v598
    %v719 = vpack.c.b16 %v605, %v602
    %v720 = vpack.c.b16 %v606, %v603
    %v721 = vpack.c.b16 %v607, %v604
    %v722 = vpack.c.b16 %v611, %v608
    %v723 = vpack.c.b16 %v612, %v609
    %v724 = vpack.c.b16 %v613, %v610
    %v725 = vpack.c.b16 %v617, %v614
    %v726 = vpack.c.b16 %v618, %v615
    %v727 = vpack.c.b16 %v619, %v616
    %v728 = vpack.c.b16 %v623, %v620
    %v729 = vpack.c.b16 %v624, %v621
    %v730 = vpack.c.b16 %v625, %v622
    %v731 = vpack.c.b16 %v629, %v626
    %v732 = vpack.c.b16 %v630, %v627
    %v733 = vpack.c.b16 %v631, %v628
    %v734 = vpack.c.b16 %v635, %v632
    %v735 = vpack.c.b16 %v636, %v633
    %v736 = vpack.c.b16 %v637, %v634
    %v737 = vpack.c.b16 %v641, %v638
    %v738 = vpack.c.b16 %v642, %v639
    %v739 = vpack.c.b16 %v643, %v640
    %836 = vmatpush.bf16.msra.mxu0 %v665
    %837 = vmatpush.bf16.msra.mxu0 %v662
    %838 = vmatpush.bf16.msra.mxu0 %v659
    %839 = vmatpush.bf16.msra.mxu0 %v656
    %840 = vmatpush.bf16.msra.mxu0 %v653
    %841 = vmatpush.bf16.msra.mxu0 %v650
    %842 = vmatpush.bf16.msra.mxu0 %v647
    %843 = vmatpush.bf16.msra.mxu0 %v644
    %844 = vmatmul.bf16.gmra.mxu0 %v192
    %v845 = vpop.f32.mrf.mxu0
    %v846 = vadd.f32 0.0, %v845
    %v847 = vpop.f32.mrf.mxu0
    %848 = vdwg.mxu0
    %849 = vmatpush.bf16.msra.mxu0 %v689
    %850 = vmatpush.bf16.msra.mxu0 %v686
    %851 = vmatpush.bf16.msra.mxu0 %v683
    %852 = vmatpush.bf16.msra.mxu0 %v680
    %853 = vmatpush.bf16.msra.mxu0 %v677
    %854 = vmatpush.bf16.msra.mxu0 %v674
    %855 = vmatpush.bf16.msra.mxu0 %v671
    %856 = vmatpush.bf16.msra.mxu0 %v668
    %857 = vmatmul.bf16.gmra.mxu0 %v193
    %v858 = vpop.f32.mrf.mxu0
    %v859 = vadd.f32 %v846, %v858
    %v860 = vpop.f32.mrf.mxu0
    %861 = vdwg.mxu0
    %862 = vmatpush.bf16.msra.mxu0 %v713
    %863 = vmatpush.bf16.msra.mxu0 %v710
    %864 = vmatpush.bf16.msra.mxu0 %v707
    %865 = vmatpush.bf16.msra.mxu0 %v704
    %866 = vmatpush.bf16.msra.mxu0 %v701
    %867 = vmatpush.bf16.msra.mxu0 %v698
    %868 = vmatpush.bf16.msra.mxu0 %v695
    %869 = vmatpush.bf16.msra.mxu0 %v692
    %870 = vmatmul.bf16.gmra.mxu0 %v194
    %v871 = vpop.f32.mrf.mxu0
    %v872 = vadd.f32 %v859, %v871
    %v873 = vpop.f32.mrf.mxu0
    %874 = vdwg.mxu0
    %875 = vmatpush.bf16.msra.mxu0 %v737
    %876 = vmatpush.bf16.msra.mxu0 %v734
    %877 = vmatpush.bf16.msra.mxu0 %v731
    %878 = vmatpush.bf16.msra.mxu0 %v728
    %879 = vmatpush.bf16.msra.mxu0 %v725
    %880 = vmatpush.bf16.msra.mxu0 %v722
    %881 = vmatpush.bf16.msra.mxu0 %v719
    %882 = vmatpush.bf16.msra.mxu0 %v716
    %883 = vmatmul.bf16.gmra.mxu0 %v195
    %v884 = vpop.f32.mrf.mxu0
    %v885 = vadd.f32 %v872, %v884
    %v886 = vpop.f32.mrf.mxu0
    %887 = vdwg.mxu0
    %888 = vmatpush.bf16.msra.mxu0 %v666
    %889 = vmatpush.bf16.msra.mxu0 %v663
    %890 = vmatpush.bf16.msra.mxu0 %v660
    %891 = vmatpush.bf16.msra.mxu0 %v657
    %892 = vmatpush.bf16.msra.mxu0 %v654
    %893 = vmatpush.bf16.msra.mxu0 %v651
    %894 = vmatpush.bf16.msra.mxu0 %v648
    %895 = vmatpush.bf16.msra.mxu0 %v645
    %896 = vmatmul.bf16.gmra.mxu0 %v192
    %v897 = vpop.f32.mrf.mxu0
    %v898 = vadd.f32 0.0, %v897
    %v899 = vpop.f32.mrf.mxu0
    %900 = vdwg.mxu0
    %901 = vmatpush.bf16.msra.mxu0 %v690
    %902 = vmatpush.bf16.msra.mxu0 %v687
    %903 = vmatpush.bf16.msra.mxu0 %v684
    %904 = vmatpush.bf16.msra.mxu0 %v681
    %905 = vmatpush.bf16.msra.mxu0 %v678
    %906 = vmatpush.bf16.msra.mxu0 %v675
    %907 = vmatpush.bf16.msra.mxu0 %v672
    %908 = vmatpush.bf16.msra.mxu0 %v669
    %909 = vmatmul.bf16.gmra.mxu0 %v193
    %v910 = vpop.f32.mrf.mxu0
    %v911 = vadd.f32 %v898, %v910
    %v912 = vpop.f32.mrf.mxu0
    %913 = vdwg.mxu0
    %914 = vmatpush.bf16.msra.mxu0 %v714
    %915 = vmatpush.bf16.msra.mxu0 %v711
    %916 = vmatpush.bf16.msra.mxu0 %v708
    %917 = vmatpush.bf16.msra.mxu0 %v705
    %918 = vmatpush.bf16.msra.mxu0 %v702
    %919 = vmatpush.bf16.msra.mxu0 %v699
    %920 = vmatpush.bf16.msra.mxu0 %v696
    %921 = vmatpush.bf16.msra.mxu0 %v693
    %922 = vmatmul.bf16.gmra.mxu0 %v194
    %v923 = vpop.f32.mrf.mxu0
    %v924 = vadd.f32 %v911, %v923
    %v925 = vpop.f32.mrf.mxu0
    %926 = vdwg.mxu0
    %927 = vmatpush.bf16.msra.mxu0 %v738
    %928 = vmatpush.bf16.msra.mxu0 %v735
    %929 = vmatpush.bf16.msra.mxu0 %v732
    %930 = vmatpush.bf16.msra.mxu0 %v729
    %931 = vmatpush.bf16.msra.mxu0 %v726
    %932 = vmatpush.bf16.msra.mxu0 %v723
    %933 = vmatpush.bf16.msra.mxu0 %v720
    %934 = vmatpush.bf16.msra.mxu0 %v717
    %935 = vmatmul.bf16.gmra.mxu0 %v195
    %v936 = vpop.f32.mrf.mxu0
    %v937 = vadd.f32 %v924, %v936
    %v938 = vpop.f32.mrf.mxu0
    %939 = vdwg.mxu0
    %940 = vmatpush.bf16.msra.mxu0 %v667
    %941 = vmatpush.bf16.msra.mxu0 %v664
    %942 = vmatpush.bf16.msra.mxu0 %v661
    %943 = vmatpush.bf16.msra.mxu0 %v658
    %944 = vmatpush.bf16.msra.mxu0 %v655
    %945 = vmatpush.bf16.msra.mxu0 %v652
    %946 = vmatpush.bf16.msra.mxu0 %v649
    %947 = vmatpush.bf16.msra.mxu0 %v646
    %948 = vmatmul.bf16.gmra.mxu0 %v192
    %v949 = vpop.f32.mrf.mxu0
    %v950 = vadd.f32 0.0, %v949
    %v951 = vpop.f32.mrf.mxu0
    %952 = vdwg.mxu0
    %953 = vmatpush.bf16.msra.mxu0 %v691
    %954 = vmatpush.bf16.msra.mxu0 %v688
    %955 = vmatpush.bf16.msra.mxu0 %v685
    %956 = vmatpush.bf16.msra.mxu0 %v682
    %957 = vmatpush.bf16.msra.mxu0 %v679
    %958 = vmatpush.bf16.msra.mxu0 %v676
    %959 = vmatpush.bf16.msra.mxu0 %v673
    %960 = vmatpush.bf16.msra.mxu0 %v670
    %961 = vmatmul.bf16.gmra.mxu0 %v193
    %v962 = vpop.f32.mrf.mxu0
    %v963 = vadd.f32 %v950, %v962
    %v964 = vpop.f32.mrf.mxu0
    %965 = vdwg.mxu0
    %966 = vmatpush.bf16.msra.mxu0 %v715
    %967 = vmatpush.bf16.msra.mxu0 %v712
    %968 = vmatpush.bf16.msra.mxu0 %v709
    %969 = vmatpush.bf16.msra.mxu0 %v706
    %970 = vmatpush.bf16.msra.mxu0 %v703
    %971 = vmatpush.bf16.msra.mxu0 %v700
    %972 = vmatpush.bf16.msra.mxu0 %v697
    %973 = vmatpush.bf16.msra.mxu0 %v694
    %974 = vmatmul.bf16.gmra.mxu0 %v194
    %v975 = vpop.f32.mrf.mxu0
    %v976 = vadd.f32 %v963, %v975
    %v977 = vpop.f32.mrf.mxu0
    %978 = vdwg.mxu0
    %979 = vmatpush.bf16.msra.mxu0 %v739
    %980 = vmatpush.bf16.msra.mxu0 %v736
    %981 = vmatpush.bf16.msra.mxu0 %v733
    %982 = vmatpush.bf16.msra.mxu0 %v730
    %983 = vmatpush.bf16.msra.mxu0 %v727
    %984 = vmatpush.bf16.msra.mxu0 %v724
    %985 = vmatpush.bf16.msra.mxu0 %v721
    %986 = vmatpush.bf16.msra.mxu0 %v718
    %987 = vmatmul.bf16.gmra.mxu0 %v195
    %v988 = vpop.f32.mrf.mxu0
    %v989 = vadd.f32 %v976, %v988
    %v990 = vpop.f32.mrf.mxu0
    %991 = vdwg.mxu0
    %v992 = vmax.f32 %v885, 0.0
    %v993 = vmax.f32 %v937, 0.0
    %v994 = vmax.f32 %v989, 0.0
    %v995 = vld [vmem:[#allocation7] sm:$0x7]
    %v997 = vperm.slane %v995, 0
    %v998 = vperm.slane %v995, 1
    %v999 = vperm.slane %v995, 2
    %v1003 = vmul.f32 %v992, %v997
    %v1004 = vmul.f32 %v993, %v998
    %v1005 = vmul.f32 %v994, %v999
    %v1006 = vadd.f32 %v1003, %v1004
    %v1007 = vadd.f32 %v1006, %v1005
    %1008 = vadd.xlane.f32.xlu0 %v1007
    %v1009 = vpop.xlane.xlu0 %1008
    %vm1010 = vcmask 7168
    %1011 = vst.msk [vmem:[%s4] sm:$0xff] %vm1010, %v1009
    // Predicated region
    $region34: #{tpu_custom_call.1} parent=1 // pred_check
      _
    $region35: #{tpu_custom_call.1} parent=1 // pred_check_branch
      %1013 = sbr.rel (0) target = $region37
    $region36: #{tpu_custom_call.1} parent=1 // pred_region
      _
    $region37: #{tpu_custom_call.1} parent=1 // pred_fallthru
      _
    // Predicated region
    $region38: #{tpu_custom_call.1} parent=1 // pred_check
      _
    $region39: #{tpu_custom_call.1} parent=1 // pred_check_branch
      %1015 = sbr.rel (0) target = $region41
    $region40: #{tpu_custom_call.1} parent=1 // pred_region
      _
    $region41: #{tpu_custom_call.1} parent=1 // pred_fallthru
      _
    %1016 = vsyncpa [#allocation3], 1
    %1017 = vsyncpa [#allocation5], 1
    %1018 = vsyncpa [#allocation8], 1

</llo_original>
